<compile_context>
chip_gen: v6e
topology: v6e:2x2x1
jax: 0.10.0
libtpu: 0.0.40
codegen_flags: <defaults>
</compile_context>

<pallas_src>
import jax
import jax.numpy as jnp
from jax.experimental import pallas as pl
from jax.experimental.pallas import tpu as pltpu


def _make_hbm_copy_kernel(chunks):
    """Build a kernel that DMA-copies `chunks` (static (start, size) row
    ranges along axis 0) from the input HBM ref to the output HBM ref."""

    def kernel(x_hbm, o_hbm, sems):
        copies = []
        # Start every chunk's DMA first so multiple DMAs are in flight
        # (DMA engines stream HBM->HBM at full bandwidth; the TC does
        # almost nothing here).
        for idx, (start, size) in enumerate(chunks):
            cp = pltpu.make_async_copy(
                x_hbm.at[pl.ds(start, size)],
                o_hbm.at[pl.ds(start, size)],
                sems.at[idx],
            )
            cp.start()
            copies.append(cp)
        for cp in copies:
            cp.wait()

    return kernel


def _materialized_copy(x: jax.Array) -> jax.Array:
    """HBM->HBM DMA copy of `x` via a single Pallas invocation."""
    itemsize = jnp.dtype(x.dtype).itemsize
    total_bytes = int(x.size) * itemsize
    n_rows = int(x.shape[0])

    # Chunk along the leading axis: ~1 MiB+ per chunk, 1..8 chunks, never
    # more chunks than rows.  >=2 chunks for multi-MiB tensors so DMAs
    # overlap; tiny tensors use a single DMA.
    desired_chunks = max(1, min(8, total_bytes // (1 << 20)))
    num_chunks = max(1, min(desired_chunks, n_rows))

    rows_per = -(-n_rows // num_chunks)  # ceil div
    chunks = []
    start = 0
    while start < n_rows:
        size = min(rows_per, n_rows - start)
        chunks.append((start, size))
        start += size

    return pl.pallas_call(
        _make_hbm_copy_kernel(chunks),
        out_shape=jax.ShapeDtypeStruct(x.shape, x.dtype),
        in_specs=[pl.BlockSpec(memory_space=pl.ANY)],   # raw HBM ref, no auto-DMA
        out_specs=pl.BlockSpec(memory_space=pl.ANY),    # raw HBM ref, written by DMA
        scratch_shapes=[pltpu.SemaphoreType.DMA((len(chunks),))],
        cost_estimate=pl.CostEstimate(
            flops=0,
            transcendentals=0,
            bytes_accessed=2 * total_bytes,
        ),
    )(x)


def print_layer(x: jax.Array, materialize: bool = False) -> jax.Array:
    # PyTorch: print(input_tensor.shape). The shape is static metadata, so
    # this is a host-side print.  NOTE: under jax.jit this fires only at
    # trace time (unlike PyTorch's per-forward print); eager calls print
    # every time, matching PyTorch.
    print(tuple(x.shape))

    # Identity layer: the fastest correct implementation is to return the
    # input unchanged (no HBM traffic, no kernel launch).
    if not materialize:
        return x

    # Degenerate cases: nothing to copy / no leading axis to chunk over.
    if x.size == 0 or x.ndim == 0:
        return x

    return _materialized_copy(x)


if __name__ == "__main__":
    key = jax.random.PRNGKey(0)
    x = jax.random.normal(key, (2, 4, 16, 16), dtype=jnp.float32)  # NCHW

    # Default path: pure identity (no kernel), per the perf review.
    y_fast = print_layer(x)
    y_fast = jax.block_until_ready(y_fast)

    # Materializing path: exercises the Pallas HBM->HBM DMA copy kernel.
    y_mat = print_layer(x, materialize=True)
    y_mat = jax.block_until_ready(y_mat)

    assert y_fast.shape == x.shape and y_fast.dtype == x.dtype
    assert y_mat.shape == x.shape and y_mat.dtype == x.dtype
    assert bool(jnp.all(y_fast == x))
    assert bool(jnp.all(y_mat == x))
    print("KERNEL_OK")
</pallas_src>

<mosaic_0001>
module attributes {stable_mosaic.version = 11 : i64} {
  func.func @kernel(%arg0: memref<2x4x16x16xf32, #tpu.memory_space<any>>, %arg1: memref<2x4x16x16xf32, #tpu.memory_space<any>>, %arg2: memref<1x!tpu.dma_semaphore, #tpu.memory_space<semaphore_mem>>) attributes {dimension_semantics = [], scalar_prefetch = 0 : i64, scratch_operands = 1 : i64, tpu.core_type = #tpu.core_type<tc>} {
    %c0_i32 = arith.constant 0 : i32
    %c0_i32_0 = arith.constant 0 : i32
    %c0_i32_1 = arith.constant 0 : i32
    %c0_i32_2 = arith.constant 0 : i32
    %c0_i32_3 = arith.constant 0 : i32
    %0 = tpu.memref_slice %arg0[%c0_i32_0, %c0_i32_1, %c0_i32_2, %c0_i32_3] : memref<2x4x16x16xf32, #tpu.memory_space<any>> -> memref<2x4x16x16xf32, #tpu.memory_space<any>>
    %c0_i32_4 = arith.constant 0 : i32
    %c0_i32_5 = arith.constant 0 : i32
    %c0_i32_6 = arith.constant 0 : i32
    %c0_i32_7 = arith.constant 0 : i32
    %1 = tpu.memref_slice %arg1[%c0_i32_4, %c0_i32_5, %c0_i32_6, %c0_i32_7] : memref<2x4x16x16xf32, #tpu.memory_space<any>> -> memref<2x4x16x16xf32, #tpu.memory_space<any>>
    %2 = tpu.memref_slice %arg2[%c0_i32] : memref<1x!tpu.dma_semaphore, #tpu.memory_space<semaphore_mem>> -> memref<1x!tpu.dma_semaphore, #tpu.memory_space<semaphore_mem>>
    %3 = tpu.memref_squeeze %2 : memref<1x!tpu.dma_semaphore, #tpu.memory_space<semaphore_mem>> -> memref<!tpu.dma_semaphore, #tpu.memory_space<semaphore_mem>>
    tpu.enqueue_dma source(%0 : memref<2x4x16x16xf32, #tpu.memory_space<any>>) target(%1 : memref<2x4x16x16xf32, #tpu.memory_space<any>>) target_semaphore(%3 : memref<!tpu.dma_semaphore, #tpu.memory_space<semaphore_mem>>)
    %c0_i32_8 = arith.constant 0 : i32
    %c0_i32_9 = arith.constant 0 : i32
    %c0_i32_10 = arith.constant 0 : i32
    %c0_i32_11 = arith.constant 0 : i32
    %c0_i32_12 = arith.constant 0 : i32
    %4 = tpu.memref_slice %arg0[%c0_i32_9, %c0_i32_10, %c0_i32_11, %c0_i32_12] : memref<2x4x16x16xf32, #tpu.memory_space<any>> -> memref<2x4x16x16xf32, #tpu.memory_space<any>>
    %c0_i32_13 = arith.constant 0 : i32
    %c0_i32_14 = arith.constant 0 : i32
    %c0_i32_15 = arith.constant 0 : i32
    %c0_i32_16 = arith.constant 0 : i32
    %5 = tpu.memref_slice %arg1[%c0_i32_13, %c0_i32_14, %c0_i32_15, %c0_i32_16] : memref<2x4x16x16xf32, #tpu.memory_space<any>> -> memref<2x4x16x16xf32, #tpu.memory_space<any>>
    %6 = tpu.memref_slice %arg2[%c0_i32_8] : memref<1x!tpu.dma_semaphore, #tpu.memory_space<semaphore_mem>> -> memref<1x!tpu.dma_semaphore, #tpu.memory_space<semaphore_mem>>
    %7 = tpu.memref_squeeze %6 : memref<1x!tpu.dma_semaphore, #tpu.memory_space<semaphore_mem>> -> memref<!tpu.dma_semaphore, #tpu.memory_space<semaphore_mem>>
    tpu.wait_dma2 semaphore(%7 : memref<!tpu.dma_semaphore, #tpu.memory_space<semaphore_mem>>) src(%4 : memref<2x4x16x16xf32, #tpu.memory_space<any>>) dst(%5 : memref<2x4x16x16xf32, #tpu.memory_space<any>>)
    return
  }
}

</mosaic_0001>

<llo_original>
// kernel: tpu_custom_call.1
$region0: #{tpu_custom_call.1}
  #allocation0 [shape = 'u32[]', space=smem, size = 0x4, offset = 0x4, fixed_abs, tag = 'smem constant byte address 0x4 - core index']
  #allocation1 [shape = 'u32[144,128]{1,0:T(1,128)}', space=vmem, size = 0x12000, scoped, tag = 'internal scratch']
  #allocation2 [shape = 's32[1]{0}', space=sflag, size = 0x4, scoped, tag = 'scratch operand']
  #allocation3 [shape = 's32[]', space=sflag, size = 0x4, offset = 0, fixed_abs, tag = 'sflag constant byte address 0x0 - dummy sync flag']
  #allocation4 [shape = 'u32[0]{0}', space=smem, size = 0, offset = 0, fixed_abs, tag = 'smem constant byte address 0x0 - null']
  %s0 = inlined_call_operand.hbm [shape: f32[2,4,16,16], index: 0, kind: input, shape index: {}]
  %s1 = inlined_call_operand.hbm [shape: f32[2,4,16,16], index: 1, kind: output, shape index: {}]
  %s2 = sld [smem:[#allocation0]]
  $region2: #{tpu_custom_call.1} parent=0
    _
  %s4 = ssub.s32 1, %s2
  %s5 = scalar_select 0, %s4, %s2
  %s7 = sshll.u32 1, 14
  %s8 = sxor.u32 4294967295, %s7
  %12 = dma.general %s0, 2048, %s1, [#allocation2], 131072, [#allocation4], 0, 0
  %s13 = smul.u32 2, 4
  %s14 = smul.u32 %s13, 16
  %s15 = smul.u32 %s14, 1
  %s16 = sshll.u32 %s15, 4
  %17 = dma.done [#allocation2], %s16
  %18 = vsyncmov [#allocation2]
  %s19 = vpop.sfrf %18
  %p20 = scmp.eq.s32.totalorder %s19, 0
  %p21 = pneg %p20
  %23 = shalt.err (%p21)

</llo_original>
